<compile_context>
chip_gen: v6e
topology: v6e:2x2x1
jax: 0.10.0
libtpu: 0.0.40
codegen_flags: <defaults>
</compile_context>

<pallas_src>
import jax
import jax.numpy as jnp
from jax.experimental import pallas as pl
from jax.experimental.pallas import tpu as pltpu


TB_MAX = 2048  # rows per batch tile; f32 x tile = 4 MiB, 8 MiB double-buffered


def _round_up(n, m):
    return ((n + m - 1) // m) * m


def sentiment_mlp_kernel(x_ref, w1_ref, b1_ref, w2_ref, b2_ref, w3_ref, b3_ref, o_ref):
    # Cast the x tile to bf16 in-kernel (no wrapper pre-pass; VPU has slack).
    x = x_ref[...].astype(jnp.bfloat16)

    # fc1 + relu (drop1 is identity in eval mode); bf16 MXU operands, f32 accumulate.
    h1 = jnp.dot(x, w1_ref[...], preferred_element_type=jnp.float32) + b1_ref[...]
    h1 = jnp.maximum(h1, 0.0)

    # fc2 + relu (drop2 is identity in eval mode).
    h2 = jnp.dot(h1.astype(jnp.bfloat16), w2_ref[...],
                 preferred_element_type=jnp.float32) + b2_ref[...]
    h2 = jnp.maximum(h2, 0.0)

    # fc3 (K=64, N=1) + sigmoid: VPU multiply + lane reduction (MXU stays free),
    # written lane-dense as a (1, 1, TB) row.
    logits = jnp.sum(h2 * w3_ref[...], axis=-1)                       # (TB,)
    logits = logits.reshape(1, 1, -1) + b3_ref[...].reshape(1, 1, 1)  # (1, 1, TB)
    o_ref[...] = jax.nn.sigmoid(logits).astype(o_ref.dtype)


def sentiment_nn_forward(x, params, *, tb_max=TB_MAX):
    """x: (B, 512), f32 (or bf16). params: weights/biases in (in, out) layout."""
    B, F = x.shape
    assert F == 512, F
    assert tb_max % 16 == 0, tb_max

    # Pad batch only to a multiple of 16 (bf16 sublane packing) — at most 15 rows.
    B_pad = _round_up(B, 16)
    if B_pad != B:
        x = jnp.pad(x, ((0, B_pad - B), (0, 0)))

    TB = min(tb_max, B_pad)
    num_tiles = pl.cdiv(B_pad, TB)  # ragged last tile allowed (masked boundary writes)

    # Resident weights: bf16 MXU operands (tiny, one-time cast); f32 biases / w3 row.
    w1 = params["w1"].astype(jnp.bfloat16)
    w2 = params["w2"].astype(jnp.bfloat16)
    b1 = params["b1"].astype(jnp.float32).reshape(1, 128)
    b2 = params["b2"].astype(jnp.float32).reshape(1, 64)
    w3_row = params["w3"].astype(jnp.float32).reshape(1, 64)
    b3 = params["b3"].astype(jnp.float32).reshape(1, 1)

    def const(a):
        # Full-extent block, constant index_map -> stays resident in VMEM across grid.
        return pl.BlockSpec(a.shape, lambda i, _nd=a.ndim: (0,) * _nd)

    x_bytes = 4 if x.dtype == jnp.float32 else 2
    flops = 2 * num_tiles * TB * (512 * 128 + 128 * 64 + 64)
    bytes_accessed = (
        B_pad * 512 * x_bytes               # x stream
        + 512 * 128 * 2 + 128 * 64 * 2      # w1, w2 (bf16)
        + (128 + 64 + 64 + 1) * 4           # biases + w3 row (f32)
        + num_tiles * TB * 4                # output
    )
    cost = pl.CostEstimate(flops=flops, transcendentals=num_tiles * TB,
                           bytes_accessed=bytes_accessed)

    out = pl.pallas_call(
        sentiment_mlp_kernel,
        out_shape=jax.ShapeDtypeStruct((num_tiles, 1, TB), jnp.float32),
        grid=(num_tiles,),
        in_specs=[
            pl.BlockSpec((TB, 512), lambda i: (i, 0)),   # x: batch-tiled, auto-pipelined
            const(w1), const(b1),
            const(w2), const(b2),
            const(w3_row), const(b3),
        ],
        out_specs=pl.BlockSpec((1, 1, TB), lambda i: (i, 0, 0)),  # lane-dense rows
        compiler_params=pltpu.CompilerParams(
            dimension_semantics=("parallel",),
            vmem_limit_bytes=32 * 1024 * 1024,  # raise v5e's 16 MiB default scoped VMEM
        ),
        cost_estimate=cost,
    )(x, w1, b1, w2, b2, w3_row, b3)

    # (num_tiles, 1, TB) -> (num_tiles*TB, 1); drop padded / ragged-tail rows.
    return out.reshape(-1, 1)[:B]


def init_params(key):
    """Deterministic synthetic parameters matching nn.Linear shapes, stored transposed
    ((in, out)) relative to PyTorch's (out, in) so the kernel computes x @ W + b."""
    k1, k2, k3, k4, k5, k6 = jax.random.split(key, 6)

    def uinit(k, shape, fan_in):
        bound = 1.0 / jnp.sqrt(fan_in)
        return jax.random.uniform(k, shape, jnp.float32, -bound, bound)

    return {
        "w1": uinit(k1, (512, 128), 512.0),
        "b1": uinit(k2, (1, 128), 512.0),
        "w2": uinit(k3, (128, 64), 128.0),
        "b2": uinit(k4, (1, 64), 128.0),
        "w3": uinit(k5, (64, 1), 64.0),
        "b3": uinit(k6, (1, 1), 64.0),
    }


def reference_forward(x, params):
    h1 = jnp.maximum(x @ params["w1"] + params["b1"], 0.0)
    h2 = jnp.maximum(h1 @ params["w2"] + params["b2"], 0.0)
    return jax.nn.sigmoid(h2 @ params["w3"] + params["b3"])


if __name__ == "__main__":
    key = jax.random.PRNGKey(0)
    k_params, k_x, k_x2 = jax.random.split(key, 3)
    params = init_params(k_params)

    # Small single-tile case.
    B = 8
    x = jax.random.normal(k_x, (B, 512), jnp.float32)
    out = jax.block_until_ready(sentiment_nn_forward(x, params))
    ref = reference_forward(x, params)  # full-f32 reference
    assert out.shape == (B, 1), out.shape
    # bf16 matmul inputs with f32 accumulation -> small deviation vs f32 reference.
    assert jnp.allclose(out, ref, atol=2e-2, rtol=2e-2), "mismatch vs JAX reference"
    assert bool(jnp.all((out >= 0.0) & (out <= 1.0))), "sigmoid range violated"

    # Multi-tile + ragged-last-tile path (exercises the batch grid and masked tail).
    B2 = 40
    x2 = jax.random.normal(k_x2, (B2, 512), jnp.float32)
    out2 = jax.block_until_ready(sentiment_nn_forward(x2, params, tb_max=32))
    ref2 = reference_forward(x2, params)
    assert out2.shape == (B2, 1), out2.shape
    assert jnp.allclose(out2, ref2, atol=2e-2, rtol=2e-2), "mismatch on multi-tile path"

    print("KERNEL_OK")
</pallas_src>

<mosaic_0001>
module attributes {stable_mosaic.version = 11 : i64} {
  func.func @sentiment_mlp_kernel(%arg0: i32, %arg1: memref<16x512xf32, #tpu.memory_space<vmem>>, %arg2: memref<512x128xbf16, #tpu.memory_space<vmem>>, %arg3: memref<1x128xf32, #tpu.memory_space<vmem>>, %arg4: memref<128x64xbf16, #tpu.memory_space<vmem>>, %arg5: memref<1x64xf32, #tpu.memory_space<vmem>>, %arg6: memref<1x64xf32, #tpu.memory_space<vmem>>, %arg7: memref<1x1xf32, #tpu.memory_space<vmem>>, %arg8: memref<1x1x16xf32, #tpu.memory_space<vmem>>) attributes {dimension_semantics = [#tpu.dimension_semantics<parallel>], iteration_bounds = array<i64: 1>, scalar_prefetch = 0 : i64, scratch_operands = 0 : i64, tpu.core_type = #tpu.core_type<tc>, window_params = [{transform_indices = @transform_0, window_bounds = array<i64: 16, 512>}, {pipeline_mode = #tpu.pipeline_mode<synchronous>, transform_indices = @transform_1, window_bounds = array<i64: 512, 128>}, {pipeline_mode = #tpu.pipeline_mode<synchronous>, transform_indices = @transform_2, window_bounds = array<i64: 1, 128>}, {pipeline_mode = #tpu.pipeline_mode<synchronous>, transform_indices = @transform_3, window_bounds = array<i64: 128, 64>}, {pipeline_mode = #tpu.pipeline_mode<synchronous>, transform_indices = @transform_4, window_bounds = array<i64: 1, 64>}, {pipeline_mode = #tpu.pipeline_mode<synchronous>, transform_indices = @transform_5, window_bounds = array<i64: 1, 64>}, {pipeline_mode = #tpu.pipeline_mode<synchronous>, transform_indices = @transform_6, window_bounds = array<i64: 1, 1>}, {transform_indices = @transform_7, window_bounds = array<i64: 1, 1, 16>}]} {
    %c0 = arith.constant 0 : index
    %c0_0 = arith.constant 0 : index
    %0 = vector.load %arg1[%c0, %c0_0] : memref<16x512xf32, #tpu.memory_space<vmem>>, vector<16x512xf32>
    %1 = arith.truncf %0 : vector<16x512xf32> to vector<16x512xbf16>
    %c0_1 = arith.constant 0 : index
    %c0_2 = arith.constant 0 : index
    %2 = vector.load %arg2[%c0_1, %c0_2] : memref<512x128xbf16, #tpu.memory_space<vmem>>, vector<512x128xbf16>
    %cst = arith.constant dense<0.000000e+00> : vector<16x128xf32>
    %3 = tpu.matmul %1, %2, %cst {dimension_numbers = #tpu.dot_dimension_numbers<[1], [0], [0], [1], [0, 0, 1, 1], [], []>} : vector<16x512xbf16>, vector<512x128xbf16>, vector<16x128xf32> -> vector<16x128xf32>
    %c0_3 = arith.constant 0 : index
    %c0_4 = arith.constant 0 : index
    %4 = vector.load %arg3[%c0_3, %c0_4] : memref<1x128xf32, #tpu.memory_space<vmem>>, vector<1x128xf32>
    %5 = vector.broadcast %4 : vector<1x128xf32> to vector<16x128xf32>
    %6 = arith.addf %3, %5 : vector<16x128xf32>
    %cst_5 = arith.constant 0.000000e+00 : f32
    %7 = vector.broadcast %cst_5 : f32 to vector<16x128xf32>
    %8 = arith.maximumf %6, %7 : vector<16x128xf32>
    %9 = arith.truncf %8 : vector<16x128xf32> to vector<16x128xbf16>
    %c0_6 = arith.constant 0 : index
    %c0_7 = arith.constant 0 : index
    %10 = vector.load %arg4[%c0_6, %c0_7] : memref<128x64xbf16, #tpu.memory_space<vmem>>, vector<128x64xbf16>
    %cst_8 = arith.constant dense<0.000000e+00> : vector<16x64xf32>
    %11 = tpu.matmul %9, %10, %cst_8 {dimension_numbers = #tpu.dot_dimension_numbers<[1], [0], [0], [1], [0, 0, 1, 1], [], []>} : vector<16x128xbf16>, vector<128x64xbf16>, vector<16x64xf32> -> vector<16x64xf32>
    %c0_9 = arith.constant 0 : index
    %c0_10 = arith.constant 0 : index
    %12 = vector.load %arg5[%c0_9, %c0_10] : memref<1x64xf32, #tpu.memory_space<vmem>>, vector<1x64xf32>
    %13 = vector.broadcast %12 : vector<1x64xf32> to vector<16x64xf32>
    %14 = arith.addf %11, %13 : vector<16x64xf32>
    %cst_11 = arith.constant 0.000000e+00 : f32
    %15 = vector.broadcast %cst_11 : f32 to vector<16x64xf32>
    %16 = arith.maximumf %14, %15 : vector<16x64xf32>
    %c0_12 = arith.constant 0 : index
    %c0_13 = arith.constant 0 : index
    %17 = vector.load %arg6[%c0_12, %c0_13] : memref<1x64xf32, #tpu.memory_space<vmem>>, vector<1x64xf32>
    %18 = vector.broadcast %17 : vector<1x64xf32> to vector<16x64xf32>
    %19 = arith.mulf %16, %18 : vector<16x64xf32>
    %cst_14 = arith.constant dense<0.000000e+00> : vector<16xf32>
    %20 = vector.multi_reduction <add>, %19, %cst_14 [1] : vector<16x64xf32> to vector<16xf32>
    %21 = vector.shape_cast %20 : vector<16xf32> to vector<1x1x16xf32>
    %c0_15 = arith.constant 0 : index
    %c0_16 = arith.constant 0 : index
    %22 = vector.load %arg7[%c0_15, %c0_16] : memref<1x1xf32, #tpu.memory_space<vmem>>, vector<1x1xf32>
    %23 = vector.shape_cast %22 : vector<1x1xf32> to vector<1x1x1xf32>
    %24 = vector.broadcast %23 : vector<1x1x1xf32> to vector<1x1x16xf32>
    %25 = arith.addf %21, %24 : vector<1x1x16xf32>
    %26 = arith.negf %25 : vector<1x1x16xf32>
    %27 = math.exp %26 : vector<1x1x16xf32>
    %cst_17 = arith.constant 1.000000e+00 : f32
    %28 = vector.broadcast %cst_17 : f32 to vector<1x1x16xf32>
    %29 = arith.addf %28, %27 : vector<1x1x16xf32>
    %30 = arith.divf %28, %29 : vector<1x1x16xf32>
    %c0_18 = arith.constant 0 : index
    %c0_19 = arith.constant 0 : index
    %c0_20 = arith.constant 0 : index
    %31 = vector.load %arg8[%c0_18, %c0_19, %c0_20] : memref<1x1x16xf32, #tpu.memory_space<vmem>>, vector<1x1x16xf32>
    tpu.vector_store %arg8[%c0_18, %c0_19, %c0_20], %30 {strides = array<i32>} : memref<1x1x16xf32, #tpu.memory_space<vmem>>, vector<1x1x16xf32>,
    return
  }
  func.func @transform_0(%arg0: i32) -> (i32, i32) {
    %c0_i32 = arith.constant 0 : i32
    %c0_i32_0 = arith.constant 0 : i32
    return %arg0, %c0_i32 : i32, i32
  }
  func.func @transform_1(%arg0: i32) -> (i32, i32) {
    %c0_i32 = arith.constant 0 : i32
    %c0_i32_0 = arith.constant 0 : i32
    %c0_i32_1 = arith.constant 0 : i32
    return %c0_i32, %c0_i32_0 : i32, i32
  }
  func.func @transform_2(%arg0: i32) -> (i32, i32) {
    %c0_i32 = arith.constant 0 : i32
    %c0_i32_0 = arith.constant 0 : i32
    %c0_i32_1 = arith.constant 0 : i32
    return %c0_i32, %c0_i32_0 : i32, i32
  }
  func.func @transform_3(%arg0: i32) -> (i32, i32) {
    %c0_i32 = arith.constant 0 : i32
    %c0_i32_0 = arith.constant 0 : i32
    %c0_i32_1 = arith.constant 0 : i32
    return %c0_i32, %c0_i32_0 : i32, i32
  }
  func.func @transform_4(%arg0: i32) -> (i32, i32) {
    %c0_i32 = arith.constant 0 : i32
    %c0_i32_0 = arith.constant 0 : i32
    %c0_i32_1 = arith.constant 0 : i32
    return %c0_i32, %c0_i32_0 : i32, i32
  }
  func.func @transform_5(%arg0: i32) -> (i32, i32) {
    %c0_i32 = arith.constant 0 : i32
    %c0_i32_0 = arith.constant 0 : i32
    %c0_i32_1 = arith.constant 0 : i32
    return %c0_i32, %c0_i32_0 : i32, i32
  }
  func.func @transform_6(%arg0: i32) -> (i32, i32) {
    %c0_i32 = arith.constant 0 : i32
    %c0_i32_0 = arith.constant 0 : i32
    %c0_i32_1 = arith.constant 0 : i32
    return %c0_i32, %c0_i32_0 : i32, i32
  }
  func.func @transform_7(%arg0: i32) -> (i32, i32, i32) {
    %c0_i32 = arith.constant 0 : i32
    %c0_i32_0 = arith.constant 0 : i32
    %c0_i32_1 = arith.constant 0 : i32
    return %arg0, %c0_i32, %c0_i32_0 : i32, i32, i32
  }
}

</mosaic_0001>

<llo_original>
// kernel: tpu_custom_call.1
$region0: #{tpu_custom_call.1}
  #allocation0 [shape = 'u32[]', space=smem, size = 0x4, offset = 0x4, fixed_abs, tag = 'smem constant byte address 0x4 - core index']
  #allocation1 [shape = 'u32[144,128]{1,0:T(1,128)}', space=vmem, size = 0x12000, scoped, tag = 'internal scratch']
  #allocation2 [shape = 'f32[1,1]{1,0:T(1,128)S(1)}', space=vmem, size = 0x200, scoped, tag = 'scoped memory for tpu_custom_call.1']
  %s0 = inlined_call_operand.vmem [shape: f32[16,512], index: 0, kind: input, shape index: {}]
  %s1 = inlined_call_operand.hbm [shape: bf16[512,128], index: 1, kind: input, shape index: {}]
  %s2 = inlined_call_operand.vmem [shape: f32[1,128], index: 2, kind: input, shape index: {}]
  %s3 = inlined_call_operand.vmem [shape: bf16[128,64], index: 3, kind: input, shape index: {}]
  %s4 = inlined_call_operand.vmem [shape: f32[1,64], index: 4, kind: input, shape index: {}]
  %s5 = inlined_call_operand.vmem [shape: f32[1,64], index: 5, kind: input, shape index: {}]
  %s6 = inlined_call_operand.<no memory space> [shape: f32[1,1], index: 6, kind: input, shape index: {}]
  %s7 = inlined_call_operand.hbm [shape: f32[1,1,16], index: 7, kind: output, shape index: {}]
  %s8 = sld [smem:[#allocation0]]
  $region42: #{tpu_custom_call.1} parent=0
    _
  %s10 = ssub.s32 1, %s8
  %s11 = scalar_select 0, %s10, %s8
  %v12 = vstv %s6
  %13 = vst [vmem:[#allocation2] sm:$0x1] %v12
  $region1: #{tpu_custom_call.1} parent=0
    #allocation3 [shape = 'u8[131072]{0}', space=vmem, size = 0x20000, scoped, tag = 'input window, operand 1, single buffered']
    #allocation4 [shape = 's32[1]{0}', space=sflag, size = 0x4, scoped, tag = 'scoped memory for tpu_custom_call.1']
    #allocation5 [shape = 's32[1]{0}', space=sflag, size = 0x4, scoped, tag = 'scoped memory for tpu_custom_call.1']
    #allocation6 [shape = 'u8[512]{0}', space=vmem, size = 0x400, scoped, tag = 'output window, operand 0, single buffered']
    %14 = vsyncpa [#allocation4], 0
    %15 = vsyncpa [#allocation5], 0
    // Predicated region
    $region2: #{tpu_custom_call.1} parent=1 // pred_check
      _
    $region3: #{tpu_custom_call.1} parent=1 // pred_check_branch
      %17 = sbr.rel (0) target = $region5
    $region4: #{tpu_custom_call.1} parent=1 // pred_region
      _
    $region5: #{tpu_custom_call.1} parent=1 // pred_fallthru
      _
    // Predicated region
    $region6: #{tpu_custom_call.1} parent=1 // pred_check
      _
    $region7: #{tpu_custom_call.1} parent=1 // pred_check_branch
      %19 = sbr.rel (0) target = $region9
    $region8: #{tpu_custom_call.1} parent=1 // pred_region
      %s21 = ssub.s32 4096, 4096
      %22 = vsyncadd [#allocation4], %s21
      %s23 = sshll.u32 [#allocation3], 4
      %s24 = int_to_ptr.vmem [resolvable:$true] %s23
      %29 = dma.hbm_to_vmem [thread:$0]  %s1, 4096, %s24, [#allocation4], 64, 64, 4
    $region9: #{tpu_custom_call.1} parent=1 // pred_fallthru
      _
    // Predicated region
    $region10: #{tpu_custom_call.1} parent=1 // pred_check
      _
    $region11: #{tpu_custom_call.1} parent=1 // pred_check_branch
      %31 = sbr.rel (0) target = $region13
    $region12: #{tpu_custom_call.1} parent=1 // pred_region
      _
    $region13: #{tpu_custom_call.1} parent=1 // pred_fallthru
      _
    // Predicated region
    $region14: #{tpu_custom_call.1} parent=1 // pred_check
      _
    $region15: #{tpu_custom_call.1} parent=1 // pred_check_branch
      %33 = sbr.rel (0) target = $region17
    $region16: #{tpu_custom_call.1} parent=1 // pred_region
      _
    $region17: #{tpu_custom_call.1} parent=1 // pred_fallthru
      _
    // Predicated region
    $region18: #{tpu_custom_call.1} parent=1 // pred_check
      _
    $region19: #{tpu_custom_call.1} parent=1 // pred_check_branch
      %35 = sbr.rel (0) target = $region21
    $region20: #{tpu_custom_call.1} parent=1 // pred_region
      _
    $region21: #{tpu_custom_call.1} parent=1 // pred_fallthru
      _
    // Predicated region
    $region22: #{tpu_custom_call.1} parent=1 // pred_check
      _
    $region23: #{tpu_custom_call.1} parent=1 // pred_check_branch
      %37 = sbr.rel (0) target = $region25
    $region24: #{tpu_custom_call.1} parent=1 // pred_region
      _
    $region25: #{tpu_custom_call.1} parent=1 // pred_fallthru
      _
    // Predicated region
    $region26: #{tpu_custom_call.1} parent=1 // pred_check
      _
    $region27: #{tpu_custom_call.1} parent=1 // pred_check_branch
      %39 = sbr.rel (0) target = $region29
    $region28: #{tpu_custom_call.1} parent=1 // pred_region
      _
    $region29: #{tpu_custom_call.1} parent=1 // pred_fallthru
      _
    // Predicated region
    $region30: #{tpu_custom_call.1} parent=1 // pred_check
      _
    $region31: #{tpu_custom_call.1} parent=1 // pred_check_branch
      %41 = sbr.rel (0) target = $region33
    $region32: #{tpu_custom_call.1} parent=1 // pred_region
      %42 = dma.done [#allocation4], 4096
    $region33: #{tpu_custom_call.1} parent=1 // pred_fallthru
      _
    %v44 = vld [vmem:[%s0] sm:$0xff]
    %v45 = vld [vmem:[%s0 + $0x8] sm:$0xff]
    %v46 = vld [vmem:[%s0 + $0x10] sm:$0xff]
    %v47 = vld [vmem:[%s0 + $0x18] sm:$0xff]
    %v48 = vld [vmem:[%s0 + $0x20] sm:$0xff]
    %v49 = vld [vmem:[%s0 + $0x28] sm:$0xff]
    %v50 = vld [vmem:[%s0 + $0x30] sm:$0xff]
    %v51 = vld [vmem:[%s0 + $0x38] sm:$0xff]
    %v52 = vpack.c.bf16 %v48, %v44
    %v53 = vpack.c.bf16 %v49, %v45
    %v54 = vpack.c.bf16 %v50, %v46
    %v55 = vpack.c.bf16 %v51, %v47
    %v56 = vld [vmem:[#allocation3] sm:$0xf]
    %v57 = vld [vmem:[#allocation3 + $0x4] sm:$0xf]
    %v58 = vld [vmem:[#allocation3 + $0x8] sm:$0xf]
    %v59 = vld [vmem:[#allocation3 + $0xc] sm:$0xf]
    %v60 = vld [vmem:[#allocation3 + $0x10] sm:$0xf]
    %v61 = vld [vmem:[#allocation3 + $0x14] sm:$0xf]
    %v62 = vld [vmem:[#allocation3 + $0x18] sm:$0xf]
    %v63 = vld [vmem:[#allocation3 + $0x1c] sm:$0xf]
    %v64 = vld [vmem:[#allocation3 + $0x20] sm:$0xf]
    %v65 = vld [vmem:[#allocation3 + $0x24] sm:$0xf]
    %v66 = vld [vmem:[#allocation3 + $0x28] sm:$0xf]
    %v67 = vld [vmem:[#allocation3 + $0x2c] sm:$0xf]
    %v68 = vld [vmem:[#allocation3 + $0x30] sm:$0xf]
    %v69 = vld [vmem:[#allocation3 + $0x34] sm:$0xf]
    %v70 = vld [vmem:[#allocation3 + $0x38] sm:$0xf]
    %v71 = vld [vmem:[#allocation3 + $0x3c] sm:$0xf]
    %v72 = vld [vmem:[#allocation3 + $0x40] sm:$0xf]
    %v73 = vld [vmem:[#allocation3 + $0x44] sm:$0xf]
    %v74 = vld [vmem:[#allocation3 + $0x48] sm:$0xf]
    %v75 = vld [vmem:[#allocation3 + $0x4c] sm:$0xf]
    %v76 = vld [vmem:[#allocation3 + $0x50] sm:$0xf]
    %v77 = vld [vmem:[#allocation3 + $0x54] sm:$0xf]
    %v78 = vld [vmem:[#allocation3 + $0x58] sm:$0xf]
    %v79 = vld [vmem:[#allocation3 + $0x5c] sm:$0xf]
    %v80 = vld [vmem:[#allocation3 + $0x60] sm:$0xf]
    %v81 = vld [vmem:[#allocation3 + $0x64] sm:$0xf]
    %v82 = vld [vmem:[#allocation3 + $0x68] sm:$0xf]
    %v83 = vld [vmem:[#allocation3 + $0x6c] sm:$0xf]
    %v84 = vld [vmem:[#allocation3 + $0x70] sm:$0xf]
    %v85 = vld [vmem:[#allocation3 + $0x74] sm:$0xf]
    %v86 = vld [vmem:[#allocation3 + $0x78] sm:$0xf]
    %v87 = vld [vmem:[#allocation3 + $0x7c] sm:$0xf]
    %v88 = vld [vmem:[#allocation3 + $0x80] sm:$0xf]
    %v89 = vld [vmem:[#allocation3 + $0x84] sm:$0xf]
    %v90 = vld [vmem:[#allocation3 + $0x88] sm:$0xf]
    %v91 = vld [vmem:[#allocation3 + $0x8c] sm:$0xf]
    %v92 = vld [vmem:[#allocation3 + $0x90] sm:$0xf]
    %v93 = vld [vmem:[#allocation3 + $0x94] sm:$0xf]
    %v94 = vld [vmem:[#allocation3 + $0x98] sm:$0xf]
    %v95 = vld [vmem:[#allocation3 + $0x9c] sm:$0xf]
    %v96 = vld [vmem:[#allocation3 + $0xa0] sm:$0xf]
    %v97 = vld [vmem:[#allocation3 + $0xa4] sm:$0xf]
    %v98 = vld [vmem:[#allocation3 + $0xa8] sm:$0xf]
    %v99 = vld [vmem:[#allocation3 + $0xac] sm:$0xf]
    %v100 = vld [vmem:[#allocation3 + $0xb0] sm:$0xf]
    %v101 = vld [vmem:[#allocation3 + $0xb4] sm:$0xf]
    %v102 = vld [vmem:[#allocation3 + $0xb8] sm:$0xf]
    %v103 = vld [vmem:[#allocation3 + $0xbc] sm:$0xf]
    %v104 = vld [vmem:[#allocation3 + $0xc0] sm:$0xf]
    %v105 = vld [vmem:[#allocation3 + $0xc4] sm:$0xf]
    %v106 = vld [vmem:[#allocation3 + $0xc8] sm:$0xf]
    %v107 = vld [vmem:[#allocation3 + $0xcc] sm:$0xf]
    %v108 = vld [vmem:[#allocation3 + $0xd0] sm:$0xf]
    %v109 = vld [vmem:[#allocation3 + $0xd4] sm:$0xf]
    %v110 = vld [vmem:[#allocation3 + $0xd8] sm:$0xf]
    %v111 = vld [vmem:[#allocation3 + $0xdc] sm:$0xf]
    %v112 = vld [vmem:[#allocation3 + $0xe0] sm:$0xf]
    %v113 = vld [vmem:[#allocation3 + $0xe4] sm:$0xf]
    %v114 = vld [vmem:[#allocation3 + $0xe8] sm:$0xf]
    %v115 = vld [vmem:[#allocation3 + $0xec] sm:$0xf]
    %v116 = vld [vmem:[#allocation3 + $0xf0] sm:$0xf]
    %v117 = vld [vmem:[#allocation3 + $0xf4] sm:$0xf]
    %v118 = vld [vmem:[#allocation3 + $0xf8] sm:$0xf]
    %v119 = vld [vmem:[#allocation3 + $0xfc] sm:$0xf]
    %v120 = vld [vmem:[%s2] sm:$0x1]
    %v122 = vlaneseq
    %v123 = vshrl.u32 %v122, 7
    %v124 = vsub.s32 0, %v123
    %v125 = vrot.slane %v120, %v124
    %v191 = vunpack.c.l.b16 %v56
    %v192 = vunpack.c.l.b16 %v57
    %v193 = vunpack.c.l.b16 %v58
    %v194 = vunpack.c.l.b16 %v59
    %v195 = vunpack.c.l.b16 %v60
    %v196 = vunpack.c.l.b16 %v61
    %v197 = vunpack.c.l.b16 %v62
    %v198 = vunpack.c.l.b16 %v63
    %v199 = vunpack.c.l.b16 %v64
    %v200 = vunpack.c.l.b16 %v65
    %v201 = vunpack.c.l.b16 %v66
    %v202 = vunpack.c.l.b16 %v67
    %v203 = vunpack.c.l.b16 %v68
    %v204 = vunpack.c.l.b16 %v69
    %v205 = vunpack.c.l.b16 %v70
    %v206 = vunpack.c.l.b16 %v71
    %v207 = vunpack.c.l.b16 %v72
    %v208 = vunpack.c.l.b16 %v73
    %v209 = vunpack.c.l.b16 %v74
    %v210 = vunpack.c.l.b16 %v75
    %v211 = vunpack.c.l.b16 %v76
    %v212 = vunpack.c.l.b16 %v77
    %v213 = vunpack.c.l.b16 %v78
    %v214 = vunpack.c.l.b16 %v79
    %v215 = vunpack.c.l.b16 %v80
    %v216 = vunpack.c.l.b16 %v81
    %v217 = vunpack.c.l.b16 %v82
    %v218 = vunpack.c.l.b16 %v83
    %v219 = vunpack.c.l.b16 %v84
    %v220 = vunpack.c.l.b16 %v85
    %v221 = vunpack.c.l.b16 %v86
    %v222 = vunpack.c.l.b16 %v87
    %v223 = vunpack.c.l.b16 %v88
    %v224 = vunpack.c.l.b16 %v89
    %v225 = vunpack.c.l.b16 %v90
    %v226 = vunpack.c.l.b16 %v91
    %v227 = vunpack.c.l.b16 %v92
    %v228 = vunpack.c.l.b16 %v93
    %v229 = vunpack.c.l.b16 %v94
    %v230 = vunpack.c.l.b16 %v95
    %v231 = vunpack.c.l.b16 %v96
    %v232 = vunpack.c.l.b16 %v97
    %v233 = vunpack.c.l.b16 %v98
    %v234 = vunpack.c.l.b16 %v99
    %v235 = vunpack.c.l.b16 %v100
    %v236 = vunpack.c.l.b16 %v101
    %v237 = vunpack.c.l.b16 %v102
    %v238 = vunpack.c.l.b16 %v103
    %v239 = vunpack.c.l.b16 %v104
    %v240 = vunpack.c.l.b16 %v105
    %v241 = vunpack.c.l.b16 %v106
    %v242 = vunpack.c.l.b16 %v107
    %v243 = vunpack.c.l.b16 %v108
    %v244 = vunpack.c.l.b16 %v109
    %v245 = vunpack.c.l.b16 %v110
    %v246 = vunpack.c.l.b16 %v111
    %v247 = vunpack.c.l.b16 %v112
    %v248 = vunpack.c.l.b16 %v113
    %v249 = vunpack.c.l.b16 %v114
    %v250 = vunpack.c.l.b16 %v115
    %v251 = vunpack.c.l.b16 %v116
    %v252 = vunpack.c.l.b16 %v117
    %v253 = vunpack.c.l.b16 %v118
    %v254 = vunpack.c.l.b16 %v119
    %v255 = vpack.c.b16 %v192, %v191
    %v256 = vpack.c.b16 %v194, %v193
    %v257 = vpack.c.b16 %v196, %v195
    %v258 = vpack.c.b16 %v198, %v197
    %v259 = vpack.c.b16 %v200, %v199
    %v260 = vpack.c.b16 %v202, %v201
    %v261 = vpack.c.b16 %v204, %v203
    %v262 = vpack.c.b16 %v206, %v205
    %v263 = vpack.c.b16 %v208, %v207
    %v264 = vpack.c.b16 %v210, %v209
    %v265 = vpack.c.b16 %v212, %v211
    %v266 = vpack.c.b16 %v214, %v213
    %v267 = vpack.c.b16 %v216, %v215
    %v268 = vpack.c.b16 %v218, %v217
    %v269 = vpack.c.b16 %v220, %v219
    %v270 = vpack.c.b16 %v222, %v221
    %v271 = vpack.c.b16 %v224, %v223
    %v272 = vpack.c.b16 %v226, %v225
    %v273 = vpack.c.b16 %v228, %v227
    %v274 = vpack.c.b16 %v230, %v229
    %v275 = vpack.c.b16 %v232, %v231
    %v276 = vpack.c.b16 %v234, %v233
    %v277 = vpack.c.b16 %v236, %v235
    %v278 = vpack.c.b16 %v238, %v237
    %v279 = vpack.c.b16 %v240, %v239
    %v280 = vpack.c.b16 %v242, %v241
    %v281 = vpack.c.b16 %v244, %v243
    %v282 = vpack.c.b16 %v246, %v245
    %v283 = vpack.c.b16 %v248, %v247
    %v284 = vpack.c.b16 %v250, %v249
    %v285 = vpack.c.b16 %v252, %v251
    %v286 = vpack.c.b16 %v254, %v253
    %319 = vmatprep.subr.bf16.mxu0 0
    %320 = vmatpush1.bf16.msra.mxu0 %v262
    %321 = vmatprep.subr.bf16.mxu0 0
    %322 = vmatpush1.bf16.msra.mxu0 %v261
    %323 = vmatprep.subr.bf16.mxu0 0
    %324 = vmatpush1.bf16.msra.mxu0 %v260
    %325 = vmatprep.subr.bf16.mxu0 0
    %326 = vmatpush1.bf16.msra.mxu0 %v259
    %327 = vmatprep.subr.bf16.mxu0 0
    %328 = vmatpush1.bf16.msra.mxu0 %v258
    %329 = vmatprep.subr.bf16.mxu0 0
    %330 = vmatpush1.bf16.msra.mxu0 %v257
    %331 = vmatprep.subr.bf16.mxu0 0
    %332 = vmatpush1.bf16.msra.mxu0 %v256
    %333 = vmatprep.subr.bf16.mxu0 0
    %334 = vmatpush1.bf16.msra.mxu0 %v255
    %335 = vmatprep.subr.bf16.mxu0 0
    %336 = vmatpush2.bf16.msra.mxu0 %v270
    %337 = vmatprep.subr.bf16.mxu0 0
    %338 = vmatpush2.bf16.msra.mxu0 %v269
    %339 = vmatprep.subr.bf16.mxu0 0
    %340 = vmatpush2.bf16.msra.mxu0 %v268
    %341 = vmatprep.subr.bf16.mxu0 0
    %342 = vmatpush2.bf16.msra.mxu0 %v267
    %343 = vmatprep.subr.bf16.mxu0 0
    %344 = vmatpush2.bf16.msra.mxu0 %v266
    %345 = vmatprep.subr.bf16.mxu0 0
    %346 = vmatpush2.bf16.msra.mxu0 %v265
    %347 = vmatprep.subr.bf16.mxu0 0
    %348 = vmatpush2.bf16.msra.mxu0 %v264
    %349 = vmatprep.subr.bf16.mxu0 0
    %350 = vmatpush2.bf16.msra.mxu0 %v263
    %351 = vmatprep.mubr.bf16.mxu0 %v53
    %352 = vmatmul.mubr.bf16.gmra.mxu0 %v52
    %v353 = vpop.f32.mrf.mxu0
    %v354 = vadd.f32 %v125, %v353
    %v355 = vpop.f32.mrf.mxu0
    %v356 = vpop.f32.mrf.mxu0
    %v357 = vadd.f32 %v125, %v356
    %v358 = vpop.f32.mrf.mxu0
    %359 = vdwg.mxu0
    %360 = vmatprep.subr.bf16.mxu0 0
    %361 = vmatpush1.bf16.msra.mxu0 %v278
    %362 = vmatprep.subr.bf16.mxu0 0
    %363 = vmatpush1.bf16.msra.mxu0 %v277
    %364 = vmatprep.subr.bf16.mxu0 0
    %365 = vmatpush1.bf16.msra.mxu0 %v276
    %366 = vmatprep.subr.bf16.mxu0 0
    %367 = vmatpush1.bf16.msra.mxu0 %v275
    %368 = vmatprep.subr.bf16.mxu0 0
    %369 = vmatpush1.bf16.msra.mxu0 %v274
    %370 = vmatprep.subr.bf16.mxu0 0
    %371 = vmatpush1.bf16.msra.mxu0 %v273
    %372 = vmatprep.subr.bf16.mxu0 0
    %373 = vmatpush1.bf16.msra.mxu0 %v272
    %374 = vmatprep.subr.bf16.mxu0 0
    %375 = vmatpush1.bf16.msra.mxu0 %v271
    %376 = vmatprep.subr.bf16.mxu0 0
    %377 = vmatpush2.bf16.msra.mxu0 %v286
    %378 = vmatprep.subr.bf16.mxu0 0
    %379 = vmatpush2.bf16.msra.mxu0 %v285
    %380 = vmatprep.subr.bf16.mxu0 0
    %381 = vmatpush2.bf16.msra.mxu0 %v284
    %382 = vmatprep.subr.bf16.mxu0 0
    %383 = vmatpush2.bf16.msra.mxu0 %v283
    %384 = vmatprep.subr.bf16.mxu0 0
    %385 = vmatpush2.bf16.msra.mxu0 %v282
    %386 = vmatprep.subr.bf16.mxu0 0
    %387 = vmatpush2.bf16.msra.mxu0 %v281
    %388 = vmatprep.subr.bf16.mxu0 0
    %389 = vmatpush2.bf16.msra.mxu0 %v280
    %390 = vmatprep.subr.bf16.mxu0 0
    %391 = vmatpush2.bf16.msra.mxu0 %v279
    %392 = vmatprep.mubr.bf16.mxu0 %v55
    %393 = vmatmul.mubr.bf16.gmra.mxu0 %v54
    %v394 = vpop.f32.mrf.mxu0
    %v395 = vadd.f32 %v354, %v394
    %v396 = vpop.f32.mrf.mxu0
    %v397 = vpop.f32.mrf.mxu0
    %v398 = vadd.f32 %v357, %v397
    %v399 = vpop.f32.mrf.mxu0
    %400 = vdwg.mxu0
    %v401 = vmax.f32 %v395, 0.0
    %v402 = vmax.f32 %v398, 0.0
    %v403 = vpack.c.bf16 %v402, %v401
    %v404 = vld [vmem:[%s3] sm:$0xf]
    %v405 = vld [vmem:[%s3 + $0x4] sm:$0xf]
    %v406 = vld [vmem:[%s3 + $0x8] sm:$0xf]
    %v407 = vld [vmem:[%s3 + $0xc] sm:$0xf]
    %v408 = vld [vmem:[%s3 + $0x10] sm:$0xf]
    %v409 = vld [vmem:[%s3 + $0x14] sm:$0xf]
    %v410 = vld [vmem:[%s3 + $0x18] sm:$0xf]
    %v411 = vld [vmem:[%s3 + $0x1c] sm:$0xf]
    %v412 = vld [vmem:[%s3 + $0x20] sm:$0xf]
    %v413 = vld [vmem:[%s3 + $0x24] sm:$0xf]
    %v414 = vld [vmem:[%s3 + $0x28] sm:$0xf]
    %v415 = vld [vmem:[%s3 + $0x2c] sm:$0xf]
    %v416 = vld [vmem:[%s3 + $0x30] sm:$0xf]
    %v417 = vld [vmem:[%s3 + $0x34] sm:$0xf]
    %v418 = vld [vmem:[%s3 + $0x38] sm:$0xf]
    %v419 = vld [vmem:[%s3 + $0x3c] sm:$0xf]
    %v420 = vld [vmem:[%s4] sm:$0x1]
    %v422 = vlaneseq
    %v423 = vshrl.u32 %v422, 7
    %v424 = vsub.s32 0, %v423
    %v425 = vrot.slane %v420, %v424
    %v443 = vunpack.c.l.b16 %v404
    %v444 = vunpack.c.l.b16 %v405
    %v445 = vunpack.c.l.b16 %v406
    %v446 = vunpack.c.l.b16 %v407
    %v447 = vunpack.c.l.b16 %v408
    %v448 = vunpack.c.l.b16 %v409
    %v449 = vunpack.c.l.b16 %v410
    %v450 = vunpack.c.l.b16 %v411
    %v451 = vunpack.c.l.b16 %v412
    %v452 = vunpack.c.l.b16 %v413
    %v453 = vunpack.c.l.b16 %v414
    %v454 = vunpack.c.l.b16 %v415
    %v455 = vunpack.c.l.b16 %v416
    %v456 = vunpack.c.l.b16 %v417
    %v457 = vunpack.c.l.b16 %v418
    %v458 = vunpack.c.l.b16 %v419
    %v459 = vpack.c.b16 %v444, %v443
    %v460 = vpack.c.b16 %v446, %v445
    %v461 = vpack.c.b16 %v448, %v447
    %v462 = vpack.c.b16 %v450, %v449
    %v463 = vpack.c.b16 %v452, %v451
    %v464 = vpack.c.b16 %v454, %v453
    %v465 = vpack.c.b16 %v456, %v455
    %v466 = vpack.c.b16 %v458, %v457
    %475 = vmatprep.subr.bf16.mxu0 0
    %476 = vmatpush1.bf16.msra.mxu0 %v466
    %477 = vmatprep.subr.bf16.mxu0 0
    %478 = vmatpush1.bf16.msra.mxu0 %v465
    %479 = vmatprep.subr.bf16.mxu0 0
    %480 = vmatpush1.bf16.msra.mxu0 %v464
    %481 = vmatprep.subr.bf16.mxu0 0
    %482 = vmatpush1.bf16.msra.mxu0 %v463
    %483 = vmatprep.subr.bf16.mxu0 0
    %484 = vmatpush1.bf16.msra.mxu0 %v462
    %485 = vmatprep.subr.bf16.mxu0 0
    %486 = vmatpush1.bf16.msra.mxu0 %v461
    %487 = vmatprep.subr.bf16.mxu0 0
    %488 = vmatpush1.bf16.msra.mxu0 %v460
    %489 = vmatprep.subr.bf16.mxu0 0
    %490 = vmatpush1.bf16.msra.mxu0 %v459
    %491 = vmatprep.subr.bf16.mxu0 0
    %492 = vmatpush2.bf16.msra.mxu0 0
    %493 = vmatprep.subr.bf16.mxu0 0
    %494 = vmatpush2.bf16.msra.mxu0 0
    %495 = vmatprep.subr.bf16.mxu0 0
    %496 = vmatpush2.bf16.msra.mxu0 0
    %497 = vmatprep.subr.bf16.mxu0 0
    %498 = vmatpush2.bf16.msra.mxu0 0
    %499 = vmatprep.subr.bf16.mxu0 0
    %500 = vmatpush2.bf16.msra.mxu0 0
    %501 = vmatprep.subr.bf16.mxu0 0
    %502 = vmatpush2.bf16.msra.mxu0 0
    %503 = vmatprep.subr.bf16.mxu0 0
    %504 = vmatpush2.bf16.msra.mxu0 0
    %505 = vmatprep.subr.bf16.mxu0 0
    %506 = vmatpush2.bf16.msra.mxu0 0
    %507 = vmatprep.mubr.bf16.mxu0 0
    %508 = vmatmul.mubr.bf16.gmra.mxu0 %v403
    %v509 = vpop.f32.mrf.mxu0
    %v510 = vadd.f32 %v425, %v509
    %v511 = vpop.f32.mrf.mxu0
    %v512 = vpop.f32.mrf.mxu0
    %v513 = vadd.f32 %v425, %v512
    %v514 = vpop.f32.mrf.mxu0
    %515 = vdwg.mxu0
    %v516 = vmax.f32 %v510, 0.0
    %v517 = vmax.f32 %v513, 0.0
    %v518 = vld [vmem:[%s5] sm:$0x1]
    %v520 = vlaneseq
    %v521 = vshrl.u32 %v520, 7
    %v522 = vsub.s32 0, %v521
    %v523 = vrot.slane %v518, %v522
    %v525 = vmul.f32 %v516, %v523
    %v526 = vmul.f32 %v517, %v523
    %vm527 = vcmask 523264
    %v528 = vsel %vm527, %v525, 0.0
    %529 = vadd.xlane.f32.xlu0 %v528
    %v530 = vpop.xlane.xlu0 %529
    %v531 = vsel %vm527, %v526, 0.0
    %532 = vadd.xlane.f32.xlu0 %v531
    %v533 = vpop.xlane.xlu0 %532
    %v534 = vld [vmem:[#allocation2] sm:$0x1]
    %536 = vset.pattern.permute.xlu0 0
    %537 = vperm.xlu0 %536, %v534
    %v538 = vpop.permute.xlu0 %537
    %v540 = vlaneseq
    %v541 = vshrl.u32 %v540, 7
    %v542 = vsub.s32 0, %v541
    %v543 = vrot.slane %v538, %v542
    %v544 = vadd.f32 %v530, %v543
    %v545 = vadd.f32 %v533, %v543
    %v546 = vxor.u32 %v544, 2147483648
    %v547 = vxor.u32 %v545, 2147483648
    %v548 = vmul.f32 %v546, 1.442695
    %v549 = vpow.pop %v548
    %v550 = vmul.f32 %v547, 1.442695
    %v551 = vpow.pop %v550
    %v552 = vadd.f32 %v549, 1.0
    %v553 = vadd.f32 %v551, 1.0
    %v554 = vrcp.pop %v552
    %v555 = vmul.f32 1.0, %v554
    %v556 = vrcp.pop %v553
    %v557 = vmul.f32 1.0, %v556
    %v560 = vlaneseq
    %v561 = vand.u32 %v560, 127
    %v562 = vlaneseq
    %v563 = vshrl.u32 %v562, 7
    %v564 = vsub.s32 %v561, %v563
    %v565 = vrot.slane %v555, %v564
    %v566 = vadd.s32 %v561, 4294967288
    %v567 = vlaneseq
    %v568 = vshrl.u32 %v567, 7
    %v569 = vsub.s32 %v566, %v568
    %v570 = vrot.slane %v557, %v569
    %vm571 = vcmask 130112
    %v572 = vsel %vm571, %v570, %v565
    %vm574 = vcmask 122880
    %575 = vst.msk [vmem:[#allocation6] sm:$0x1] %vm574, %v572
    // Predicated region
    $region34: #{tpu_custom_call.1} parent=1 // pred_check
      _
    $region35: #{tpu_custom_call.1} parent=1 // pred_check_branch
      %577 = sbr.rel (0) target = $region37
    $region36: #{tpu_custom_call.1} parent=1 // pred_region
      %s579 = ssub.s32 16, 16
      %580 = vsyncadd [#allocation5], %s579
      %s582 = sshll.u32 [#allocation6], 4
      %s583 = int_to_ptr.vmem [resolvable:$true] %s582
      %585 = dma.vmem_to_hbm [thread:$0]  %s583, 16, %s7, [#allocation5]
    $region37: #{tpu_custom_call.1} parent=1 // pred_fallthru
      _
    // Predicated region
    $region38: #{tpu_custom_call.1} parent=1 // pred_check
      _
    $region39: #{tpu_custom_call.1} parent=1 // pred_check_branch
      %587 = sbr.rel (0) target = $region41
    $region40: #{tpu_custom_call.1} parent=1 // pred_region
      %588 = dma.done [#allocation5], 16
    $region41: #{tpu_custom_call.1} parent=1 // pred_fallthru
      _
    %589 = vsyncpa [#allocation4], 1
    %590 = vsyncpa [#allocation5], 1

</llo_original>
